<compile_context>
chip_gen: v7x
topology: tpu7x:2x2x1
jax: 0.10.0
libtpu: 0.0.40
codegen_flags: <defaults>
</compile_context>

<pallas_src>
import functools

import jax
import jax.numpy as jnp
from jax.experimental import pallas as pl
from jax.experimental.pallas import tpu as pltpu


def _round_up(n, m):
    return ((n + m - 1) // m) * m


def _layernorm_kernel(x_ref, gamma_ref, beta_ref, o_ref, *, eps, features):
    x = x_ref[...].astype(jnp.float32)                               # (tile_rows, F)

    # Row mean via multiply by precomputed 1/F (no wide divide).
    mean = jnp.sum(x, axis=-1, keepdims=True) * jnp.float32(1.0 / features)
    centered = x - mean

    # torch.std default: unbiased estimator (divide by N-1).
    sq = jnp.sum(centered * centered, axis=-1, keepdims=True)
    if features > 1:
        var = sq * jnp.float32(1.0 / (features - 1))
    else:
        # TODO(synk): features == 1 yields 0/0 (NaN) at runtime, same as torch.std of one element.
        var = sq / jnp.float32(features - 1)
    std = jnp.sqrt(var)

    # Exact per-row reciprocal on a (tile_rows, 1) column; the wide tensor only sees
    # multiplies/adds (VPU), keeping us under the HBM roofline on all generations.
    inv = 1.0 / (std + jnp.float32(eps))

    gamma = gamma_ref[...]                                           # (1, F), already f32
    beta = beta_ref[...]                                             # (1, F), already f32
    o_ref[...] = (centered * inv * gamma + beta).astype(o_ref.dtype)


def _pick_tile_rows(rows, features, in_dtype, out_dtype):
    """VMEM-, dtype- and generation-aware row-tile selection + vmem limit."""
    in_item = jnp.dtype(in_dtype).itemsize
    out_item = jnp.dtype(out_dtype).itemsize
    # Sublane packing: 8 rows/vreg for 32-bit, 16 for 16-bit, 32 for 8-bit dtypes.
    pack = max(8, 32 // max(in_item, 1))

    try:
        vmem_cap = int(pltpu.get_tpu_info().vmem_capacity_bytes)
    except Exception:
        vmem_cap = 64 * 1024 * 1024   # conservative fallback (v7x per-TC VMEM)

    # Per-row working set: double-buffered input + output tiles (native dtype) plus
    # ~2 full-width f32 intermediates (x_f32, centered) materialized in the kernel body.
    bytes_per_row = max(1, features * (2 * in_item + 2 * out_item + 2 * 4))
    # ~40% of VMEM for the pipelined tiles: keeps blocks large on 64-MiB parts (v7x)
    # while leaving headroom on 128-MiB parts (v5e/v6e).
    budget = min((vmem_cap * 2) // 5, 48 << 20)

    # Row cap: allow taller tiles for narrow feature dims so each block stays multi-MiB
    # and the ~0.35 us/step grid overhead is amortized.
    cap = 4096 if features <= 512 else 1024

    tile = budget // bytes_per_row
    tile = max(pack, min(int(tile), cap))
    tile = (tile // pack) * pack
    tile = min(tile, _round_up(rows, pack))

    # Prefer >= ~4 grid steps so the pipeline reaches steady state (prologue/epilogue DMA
    # not exposed) and v7x's two TensorCores each get >= 2 balanced steps. Never shrink
    # below one vreg-pack of rows.
    steps = -(-rows // tile)
    if steps < 4 and rows >= 4 * pack:
        tile = _round_up(-(-rows // 4), pack)

    # Scoped-VMEM limit: comfortably above the working set, with compiler-scratch headroom
    # (~80 MiB on 128-MiB parts, ~40 MiB on v7x's 64-MiB parts).
    vmem_limit = max(32 << 20, min(int(vmem_cap * 5 // 8), 96 << 20))
    return tile, vmem_limit


def layernorm_pallas(x, a_2, b_2, eps=1e-6, tile_rows=None):
    """x: (..., features). a_2, b_2: (features,)."""
    orig_shape = x.shape
    features = orig_shape[-1]
    rows = 1
    for d in orig_shape[:-1]:
        rows *= d
    x2 = x.reshape(rows, features)
    out_dtype = x.dtype

    auto_tile, vmem_limit = _pick_tile_rows(rows, features, x.dtype, out_dtype)
    if tile_rows is None:
        tile_rows = auto_tile

    # Pre-cast gamma/beta to f32 once (no per-grid-step cast); (1, F) for lane layout.
    gamma = a_2.astype(jnp.float32).reshape(1, features)
    beta = b_2.astype(jnp.float32).reshape(1, features)

    # Non-divisible row counts handled by Pallas partial last block: LayerNorm is strictly
    # per-row, so garbage rows read in the last block are computed and then dropped on store.
    grid = (pl.cdiv(rows, tile_rows),)
    kernel = functools.partial(_layernorm_kernel, eps=eps, features=features)

    out2 = pl.pallas_call(
        kernel,
        out_shape=jax.ShapeDtypeStruct((rows, features), out_dtype),
        grid_spec=pltpu.PrefetchScalarGridSpec(
            num_scalar_prefetch=0,
            grid=grid,
            in_specs=[
                # Last dim = full feature extent (valid even when F % 128 != 0).
                pl.BlockSpec((tile_rows, features), lambda i: (i, 0)),
                # Constant index_map -> gamma/beta stay resident, no re-DMA per step.
                pl.BlockSpec((1, features), lambda i: (0, 0)),
                pl.BlockSpec((1, features), lambda i: (0, 0)),
            ],
            out_specs=pl.BlockSpec((tile_rows, features), lambda i: (i, 0)),
        ),
        compiler_params=pltpu.CompilerParams(
            dimension_semantics=("parallel",),
            vmem_limit_bytes=vmem_limit,
        ),
    )(x2, gamma, beta)

    return out2.reshape(orig_shape)


def layernorm_ref(x, a_2, b_2, eps=1e-6):
    mean = jnp.mean(x, axis=-1, keepdims=True)
    # unbiased std, matching torch.std default
    var = jnp.sum((x - mean) ** 2, axis=-1, keepdims=True) / (x.shape[-1] - 1)
    std = jnp.sqrt(var)
    return a_2 * (x - mean) / (std + eps) + b_2


if __name__ == "__main__":
    key = jax.random.PRNGKey(0)
    batch, seq, hidden = 2, 8, 32

    x = jax.random.normal(key, (batch, seq, hidden), dtype=jnp.float32)

    # Deterministic parameter init matching nn.Parameter(torch.ones/zeros(features))
    a_2 = jnp.ones((hidden,), dtype=jnp.float32)
    b_2 = jnp.zeros((hidden,), dtype=jnp.float32)

    out = layernorm_pallas(x, a_2, b_2, eps=1e-6)
    out = jax.block_until_ready(out)

    ref = layernorm_ref(x, a_2, b_2, eps=1e-6)
    assert out.shape == x.shape
    assert jnp.allclose(out, ref, atol=1e-5, rtol=1e-5), "mismatch vs reference"

    print("KERNEL_OK")
</pallas_src>

<mosaic_0001>
module attributes {stable_mosaic.version = 11 : i64} {
  func.func @_layernorm_kernel(%arg0: i32, %arg1: memref<16x32xf32, #tpu.memory_space<vmem>>, %arg2: memref<1x32xf32, #tpu.memory_space<vmem>>, %arg3: memref<1x32xf32, #tpu.memory_space<vmem>>, %arg4: memref<16x32xf32, #tpu.memory_space<vmem>>) attributes {dimension_semantics = [#tpu.dimension_semantics<parallel>], iteration_bounds = array<i64: 1>, scalar_prefetch = 0 : i64, scratch_operands = 0 : i64, tpu.core_type = #tpu.core_type<tc>, window_params = [{transform_indices = @transform_0, window_bounds = array<i64: 16, 32>}, {pipeline_mode = #tpu.pipeline_mode<synchronous>, transform_indices = @transform_1, window_bounds = array<i64: 1, 32>}, {pipeline_mode = #tpu.pipeline_mode<synchronous>, transform_indices = @transform_2, window_bounds = array<i64: 1, 32>}, {transform_indices = @transform_3, window_bounds = array<i64: 16, 32>}]} {
    %c0 = arith.constant 0 : index
    %c0_0 = arith.constant 0 : index
    %0 = vector.load %arg1[%c0, %c0_0] : memref<16x32xf32, #tpu.memory_space<vmem>>, vector<16x32xf32>
    %cst = arith.constant dense<0.000000e+00> : vector<16xf32>
    %1 = vector.multi_reduction <add>, %0, %cst [1] : vector<16x32xf32> to vector<16xf32>
    %2 = vector.shape_cast %1 : vector<16xf32> to vector<16x1xf32>
    %cst_1 = arith.constant 3.125000e-02 : f32
    %3 = vector.broadcast %cst_1 : f32 to vector<16x1xf32>
    %4 = arith.mulf %2, %3 : vector<16x1xf32>
    %5 = vector.broadcast %4 : vector<16x1xf32> to vector<16x32xf32>
    %6 = arith.subf %0, %5 : vector<16x32xf32>
    %7 = arith.mulf %6, %6 : vector<16x32xf32>
    %cst_2 = arith.constant dense<0.000000e+00> : vector<16xf32>
    %8 = vector.multi_reduction <add>, %7, %cst_2 [1] : vector<16x32xf32> to vector<16xf32>
    %9 = vector.shape_cast %8 : vector<16xf32> to vector<16x1xf32>
    %cst_3 = arith.constant 0.0322580636 : f32
    %10 = vector.broadcast %cst_3 : f32 to vector<16x1xf32>
    %11 = arith.mulf %9, %10 : vector<16x1xf32>
    %12 = math.sqrt %11 : vector<16x1xf32>
    %cst_4 = arith.constant 9.99999997E-7 : f32
    %13 = vector.broadcast %cst_4 : f32 to vector<16x1xf32>
    %14 = arith.addf %12, %13 : vector<16x1xf32>
    %cst_5 = arith.constant 1.000000e+00 : f32
    %15 = vector.broadcast %cst_5 : f32 to vector<16x1xf32>
    %16 = arith.divf %15, %14 : vector<16x1xf32>
    %c0_6 = arith.constant 0 : index
    %c0_7 = arith.constant 0 : index
    %17 = vector.load %arg2[%c0_6, %c0_7] : memref<1x32xf32, #tpu.memory_space<vmem>>, vector<1x32xf32>
    %c0_8 = arith.constant 0 : index
    %c0_9 = arith.constant 0 : index
    %18 = vector.load %arg3[%c0_8, %c0_9] : memref<1x32xf32, #tpu.memory_space<vmem>>, vector<1x32xf32>
    %19 = vector.broadcast %16 : vector<16x1xf32> to vector<16x32xf32>
    %20 = arith.mulf %6, %19 : vector<16x32xf32>
    %21 = vector.broadcast %17 : vector<1x32xf32> to vector<16x32xf32>
    %22 = arith.mulf %20, %21 : vector<16x32xf32>
    %23 = vector.broadcast %18 : vector<1x32xf32> to vector<16x32xf32>
    %24 = arith.addf %22, %23 : vector<16x32xf32>
    %c0_10 = arith.constant 0 : index
    %c0_11 = arith.constant 0 : index
    %25 = vector.load %arg4[%c0_10, %c0_11] : memref<16x32xf32, #tpu.memory_space<vmem>>, vector<16x32xf32>
    tpu.vector_store %arg4[%c0_10, %c0_11], %24 {strides = array<i32>} : memref<16x32xf32, #tpu.memory_space<vmem>>, vector<16x32xf32>,
    return
  }
  func.func @transform_0(%arg0: i32) -> (i32, i32) {
    %c0_i32 = arith.constant 0 : i32
    %c0_i32_0 = arith.constant 0 : i32
    return %arg0, %c0_i32 : i32, i32
  }
  func.func @transform_1(%arg0: i32) -> (i32, i32) {
    %c0_i32 = arith.constant 0 : i32
    %c0_i32_0 = arith.constant 0 : i32
    %c0_i32_1 = arith.constant 0 : i32
    return %c0_i32, %c0_i32_0 : i32, i32
  }
  func.func @transform_2(%arg0: i32) -> (i32, i32) {
    %c0_i32 = arith.constant 0 : i32
    %c0_i32_0 = arith.constant 0 : i32
    %c0_i32_1 = arith.constant 0 : i32
    return %c0_i32, %c0_i32_0 : i32, i32
  }
  func.func @transform_3(%arg0: i32) -> (i32, i32) {
    %c0_i32 = arith.constant 0 : i32
    %c0_i32_0 = arith.constant 0 : i32
    return %arg0, %c0_i32 : i32, i32
  }
}

</mosaic_0001>

<llo_original>
// kernel: tpu_custom_call.1
$region0: #{tpu_custom_call.1}
  #allocation0 [shape = 'u32[]', space=smem, size = 0x4, offset = 0x4, fixed_abs, tag = 'smem constant byte address 0x4 - core index']
  #allocation1 [shape = 'u32[144,128]{1,0:T(1,128)}', space=vmem, size = 0x12000, scoped, tag = 'internal scratch']
  %s0 = inlined_call_operand.hbm [shape: f32[16,32], index: 0, kind: input, shape index: {}]
  %s1 = inlined_call_operand.vmem [shape: f32[1,32], index: 1, kind: input, shape index: {}]
  %s2 = inlined_call_operand.vmem [shape: f32[1,32], index: 2, kind: input, shape index: {}]
  %s3 = inlined_call_operand.hbm [shape: f32[16,32], index: 3, kind: output, shape index: {}]
  %s4 = sld [smem:[#allocation0]]
  $region26: #{tpu_custom_call.1} parent=0
    _
  %s6 = ssub.s32 1, %s4
  %s7 = scalar_select 0, %s6, %s4
  $region1: #{tpu_custom_call.1} parent=0
    #allocation2 [shape = 'u8[8192]{0}', space=vmem, size = 0x2000, scoped, tag = 'input window, operand 0, single buffered']
    #allocation3 [shape = 's32[1]{0}', space=sflag, size = 0x4, scoped, tag = 'scoped memory for tpu_custom_call.1']
    #allocation4 [shape = 's32[1]{0}', space=sflag, size = 0x4, scoped, tag = 'scoped memory for tpu_custom_call.1']
    #allocation5 [shape = 'u8[8192]{0}', space=vmem, size = 0x2000, scoped, tag = 'output window, operand 0, single buffered']
    %8 = vsyncpa [#allocation3], 0
    %9 = vsyncpa [#allocation4], 0
    // Predicated region
    $region2: #{tpu_custom_call.1} parent=1 // pred_check
      _
    $region3: #{tpu_custom_call.1} parent=1 // pred_check_branch
      %11 = sbr.rel (0) target = $region5
    $region4: #{tpu_custom_call.1} parent=1 // pred_region
      %s13 = ssub.s32 256, 256
      %14 = vsyncadd [#allocation3], %s13
      %s15 = sshll.u32 [#allocation2], 4
      %s16 = int_to_ptr.vmem [resolvable:$true] %s15
      %21 = dma.hbm_to_vmem [thread:$0]  %s0, 256, %s16, [#allocation3], 128, 128, 8
    $region5: #{tpu_custom_call.1} parent=1 // pred_fallthru
      _
    // Predicated region
    $region6: #{tpu_custom_call.1} parent=1 // pred_check
      _
    $region7: #{tpu_custom_call.1} parent=1 // pred_check_branch
      %23 = sbr.rel (0) target = $region9
    $region8: #{tpu_custom_call.1} parent=1 // pred_region
      _
    $region9: #{tpu_custom_call.1} parent=1 // pred_fallthru
      _
    // Predicated region
    $region10: #{tpu_custom_call.1} parent=1 // pred_check
      _
    $region11: #{tpu_custom_call.1} parent=1 // pred_check_branch
      %25 = sbr.rel (0) target = $region13
    $region12: #{tpu_custom_call.1} parent=1 // pred_region
      _
    $region13: #{tpu_custom_call.1} parent=1 // pred_fallthru
      _
    // Predicated region
    $region14: #{tpu_custom_call.1} parent=1 // pred_check
      _
    $region15: #{tpu_custom_call.1} parent=1 // pred_check_branch
      %27 = sbr.rel (0) target = $region17
    $region16: #{tpu_custom_call.1} parent=1 // pred_region
      %28 = dma.done [#allocation3], 256
    $region17: #{tpu_custom_call.1} parent=1 // pred_fallthru
      _
    %v29 = vld [vmem:[#allocation2] sm:$0xff]
    %v30 = vld [vmem:[#allocation2 + $0x8] sm:$0xff]
    %vm31 = vcmask 261120
    %v32 = vsel %vm31, %v29, 0.0
    %33 = vadd.xlane.f32.xlu0 %v32
    %v34 = vpop.xlane.xlu0 %33
    %v35 = vsel %vm31, %v30, 0.0
    %36 = vadd.xlane.f32.xlu0 %v35
    %v37 = vpop.xlane.xlu0 %36
    %v38 = vmul.f32 %v34, 0.03125
    %v39 = vmul.f32 %v37, 0.03125
    %v40 = vsub.f32 %v29, %v38
    %v41 = vsub.f32 %v30, %v39
    %v42 = vmul.f32 %v40, %v40
    %v43 = vmul.f32 %v41, %v41
    %v44 = vsel %vm31, %v42, 0.0
    %45 = vadd.xlane.f32.xlu0 %v44
    %v46 = vpop.xlane.xlu0 %45
    %v47 = vsel %vm31, %v43, 0.0
    %48 = vadd.xlane.f32.xlu0 %v47
    %v49 = vpop.xlane.xlu0 %48
    %v50 = vmul.f32 %v46, 0.032258064
    %v51 = vmul.f32 %v49, 0.032258064
    %v52 = vrsqrt.pop %v50
    %v53 = vmul.f32 %v50, %v52
    %vm54 = vcmp.eq.f32.partialorder %v50, inf
    %v55 = vsel %vm54, %v50, %v53
    %vm56 = vcmp.eq.f32.partialorder %v50, 0.0
    %v57 = vand.u32 %v50, 2147483648
    %v58 = vsel %vm56, %v57, %v55
    %v59 = vrsqrt.pop %v51
    %v60 = vmul.f32 %v51, %v59
    %vm61 = vcmp.eq.f32.partialorder %v51, inf
    %v62 = vsel %vm61, %v51, %v60
    %vm63 = vcmp.eq.f32.partialorder %v51, 0.0
    %v64 = vand.u32 %v51, 2147483648
    %v65 = vsel %vm63, %v64, %v62
    %v66 = vadd.f32 %v58, 1e-06
    %v67 = vadd.f32 %v65, 1e-06
    %v68 = vrcp.pop %v66
    %v69 = vmul.f32 1.0, %v68
    %v70 = vrcp.pop %v67
    %v71 = vmul.f32 1.0, %v70
    %v72 = vld [vmem:[%s1] sm:$0x1]
    %v73 = vld [vmem:[%s2] sm:$0x1]
    %v74 = vmul.f32 %v40, %v69
    %v75 = vmul.f32 %v41, %v71
    %v77 = vlaneseq
    %v78 = vshrl.u32 %v77, 7
    %v79 = vsub.s32 0, %v78
    %v80 = vrot.slane %v72, %v79
    %v82 = vmul.f32 %v74, %v80
    %v83 = vmul.f32 %v75, %v80
    %v85 = vlaneseq
    %v86 = vshrl.u32 %v85, 7
    %v87 = vsub.s32 0, %v86
    %v88 = vrot.slane %v73, %v87
    %v90 = vadd.f32 %v82, %v88
    %v91 = vadd.f32 %v83, %v88
    %92 = vst.msk [vmem:[#allocation5] sm:$0xff] %vm31, %v90
    %93 = vst.msk [vmem:[#allocation5 + $0x8] sm:$0xff] %vm31, %v91
    // Predicated region
    $region18: #{tpu_custom_call.1} parent=1 // pred_check
      _
    $region19: #{tpu_custom_call.1} parent=1 // pred_check_branch
      %95 = sbr.rel (0) target = $region21
    $region20: #{tpu_custom_call.1} parent=1 // pred_region
      %s97 = ssub.s32 256, 256
      %98 = vsyncadd [#allocation4], %s97
      %s99 = sshll.u32 [#allocation5], 4
      %s100 = int_to_ptr.vmem [resolvable:$true] %s99
      %105 = dma.vmem_to_hbm [thread:$0]  %s100, 256, %s3, [#allocation4], 128, 128, 8
    $region21: #{tpu_custom_call.1} parent=1 // pred_fallthru
      _
    // Predicated region
    $region22: #{tpu_custom_call.1} parent=1 // pred_check
      _
    $region23: #{tpu_custom_call.1} parent=1 // pred_check_branch
      %107 = sbr.rel (0) target = $region25
    $region24: #{tpu_custom_call.1} parent=1 // pred_region
      %108 = dma.done [#allocation4], 256
    $region25: #{tpu_custom_call.1} parent=1 // pred_fallthru
      _
    %109 = vsyncpa [#allocation3], 1
    %110 = vsyncpa [#allocation4], 1

</llo_original>
